<compile_context>
chip_gen: v7x
topology: tpu7x:2x2x1
jax: 0.10.0
libtpu: 0.0.40
codegen_flags: <defaults>
</compile_context>

<pallas_src>
import functools
import math

import jax
import jax.numpy as jnp
from jax.experimental import pallas as pl
from jax.experimental.pallas import tpu as pltpu


# ----------------------------------------------------------------------------
# Synthetic stand-in for PIDNet's `config` object.
# ----------------------------------------------------------------------------
class _Loss:
    BALANCE_WEIGHTS = [0.4, 1.0]
    SB_WEIGHTS = 1.0


class _Config:
    LOSS = _Loss()


config = _Config()

# Loss sentinel for ignored / padded pixels in the OHEM path: strictly
# negative, so `loss > threshold` (threshold >= 0) can never select them, and
# they are excluded from the histogram (bin index -1), so they never perturb
# the k-th order statistic.
_INVALID_LOSS = -1.0

# Histogram bins for the OHEM threshold: 127 uniform bins over
# [0, -log(thres)) + 1 overflow bin.  128 keeps the one-hot epilogue's VALU
# cost around the level of the logits DMA; it is the knob trading threshold
# resolution vs VALU work.
_NBINS = 128


def _round_up(x, m):
    return ((x + m - 1) // m) * m


def _hist_chunk(tl):
    """Largest lane-chunk in {512,256,128} dividing tl (tl is a mult. of 128)."""
    for ch in (512, 256, 128):
        if tl % ch == 0:
            return ch
    return 128


# ----------------------------------------------------------------------------
# Shared per-pixel cross-entropy body.
#   score block : (1, C, TL)  -- classes on sublanes, pixels on lanes
#   target block: (1, 1, TL)
# Returns (loss, valid) of shape (1, TL).
# ----------------------------------------------------------------------------
def _ce_logits_body(score_ref, target_ref, ignore_label, hw, tl):
    logits = score_ref[0].astype(jnp.float32)                    # (C, TL)
    tgt = target_ref[0]                                          # (1, TL) int32

    # Mask the tail tile (pixel index >= H*W) in-kernel instead of padding the
    # logits on the host.
    lane = jax.lax.broadcasted_iota(jnp.int32, tgt.shape, 1)     # (1, TL)
    in_range = (pl.program_id(1) * tl + lane) < hw
    valid = jnp.logical_and(tgt != ignore_label, in_range)       # (1, TL)
    tgt_c = jnp.where(valid, tgt, 0)

    # log-softmax reduction along the class (sublane) axis.
    m = jnp.max(logits, axis=0, keepdims=True)                   # (1, TL)
    e = jnp.exp(logits - m)
    lse = jnp.log(jnp.sum(e, axis=0, keepdims=True)) + m         # (1, TL)

    cls = jax.lax.broadcasted_iota(jnp.int32, logits.shape, 0)   # (C, TL)
    onehot = (cls == tgt_c).astype(jnp.float32)                  # (C, TL)
    logit_t = jnp.sum(logits * onehot, axis=0, keepdims=True)    # (1, TL)

    loss = lse - logit_t                                         # -log_softmax[target]
    return loss, valid


# ----------------------------------------------------------------------------
# Kernel 1a (aux heads): per-pixel CE only (reduction='none', ignore -> 0).
# ----------------------------------------------------------------------------
def ce_loss_kernel(score_ref, target_ref, loss_ref, *, ignore_label, hw, tl):
    loss, valid = _ce_logits_body(score_ref, target_ref, ignore_label, hw, tl)
    loss_ref[0] = jnp.where(valid, loss, 0.0)


# ----------------------------------------------------------------------------
# Kernel 1b (OHEM head): per-pixel CE (ignore -> negative sentinel) + per-block
# loss histogram epilogue (replaces the former prob stream and top_k).
# ----------------------------------------------------------------------------
def ce_ohem_kernel(score_ref, target_ref, loss_ref, hist_ref, idx_ref, *,
                   ignore_label, hw, tl, nbins, inv_bin_w):
    loss, valid = _ce_logits_body(score_ref, target_ref, ignore_label, hw, tl)
    loss_ref[0] = jnp.where(valid, loss, _INVALID_LOSS)

    # --- histogram epilogue (for the OHEM threshold CDF) ---------------------
    idx = jnp.floor(loss * inv_bin_w).astype(jnp.int32)
    idx = jnp.clip(idx, 0, nbins - 1)
    idx_ref[...] = jnp.where(valid, idx, -1)          # -1 never matches a bin

    bins = jax.lax.broadcasted_iota(jnp.int32, (nbins, 1), 0)    # (nbins, 1)
    ch = _hist_chunk(tl)
    ngrp = ch // 128

    def body(i, acc):
        start = pl.multiple_of(i * ch, ch)
        chunk = idx_ref[:, pl.ds(start, ch)]          # (1, ch)
        m = (chunk == bins).astype(jnp.float32)       # (nbins, ch) one-hot
        part = m[:, 0:128]
        for g in range(1, ngrp):                      # fold lane groups
            part = part + m[:, g * 128:(g + 1) * 128]
        return acc + part

    acc = jax.lax.fori_loop(0, tl // ch, body,
                            jnp.zeros((nbins, 128), jnp.float32))
    hist_ref[0] = jnp.sum(acc, axis=1, keepdims=True)             # (nbins, 1)


def _per_pixel_ce_loss(score, target, ignore_label, tile_lanes,
                       with_hist=False, thresh=0.7):
    """score: (N, C, H, W) any float dtype (bf16 OK); target: (N, H, W) ints.

    Returns (loss, hist_blocks_or_None, TL, G).  loss has shape (N,1,HW_ceil);
    hist_blocks (if requested) has shape (N*G, _NBINS, 1).
    """
    N, C, H, W = score.shape
    HW = H * W
    TL = min(_round_up(tile_lanes, 128), _round_up(HW, 128))     # lanes / block
    G = -(-HW // TL)
    HW_ceil = G * TL

    # NCHW -> (N, C, HW) is a free reshape (contiguous); keep logits dtype.
    score3 = score.reshape(N, C, HW)
    # TODO(synk): targets could be packed to int8/int16 (num_classes < 256) to
    # shave another 2-3 B/px of HBM traffic.
    target3 = target.reshape(N, 1, HW).astype(jnp.int32)

    in_specs = [pl.BlockSpec((1, C, TL), lambda n, j: (n, 0, j)),
                pl.BlockSpec((1, 1, TL), lambda n, j: (n, 0, j))]
    loss_spec = pl.BlockSpec((1, 1, TL), lambda n, j: (n, 0, j))
    params = pltpu.CompilerParams(dimension_semantics=("parallel", "parallel"))

    if not with_hist:
        kernel = functools.partial(ce_loss_kernel, ignore_label=ignore_label,
                                   hw=HW, tl=TL)
        loss = pl.pallas_call(
            kernel,
            out_shape=jax.ShapeDtypeStruct((N, 1, HW_ceil), jnp.float32),
            grid_spec=pltpu.PrefetchScalarGridSpec(
                num_scalar_prefetch=0, grid=(N, G),
                in_specs=in_specs, out_specs=loss_spec),
            compiler_params=params,
        )(score3, target3)
        return loss, None, TL, G

    t = -math.log(thresh)                      # loss-space image of `thresh`
    inv_bin_w = (_NBINS - 1) / t
    kernel = functools.partial(ce_ohem_kernel, ignore_label=ignore_label,
                               hw=HW, tl=TL, nbins=_NBINS, inv_bin_w=inv_bin_w)
    hist_spec = pl.BlockSpec((1, _NBINS, 1), lambda n, j: (n * G + j, 0, 0))
    loss, hist = pl.pallas_call(
        kernel,
        out_shape=(jax.ShapeDtypeStruct((N, 1, HW_ceil), jnp.float32),
                   jax.ShapeDtypeStruct((N * G, _NBINS, 1), jnp.float32)),
        grid_spec=pltpu.PrefetchScalarGridSpec(
            num_scalar_prefetch=0, grid=(N, G),
            in_specs=in_specs, out_specs=(loss_spec, hist_spec),
            scratch_shapes=[pltpu.VMEM((1, TL), jnp.int32)]),
        compiler_params=params,
    )(score3, target3)
    return loss, hist, TL, G


# ----------------------------------------------------------------------------
# Kernel 2: thresholded sum / count of the loss map, accumulated per image
# over the pixel-block axis (marked "arbitrary").  Threshold is scalar-prefetch.
# ----------------------------------------------------------------------------
def ohem_partial_kernel(thr_ref, loss_ref, sum_ref, cnt_ref):
    @pl.when(pl.program_id(1) == 0)
    def _():
        sum_ref[...] = jnp.zeros_like(sum_ref)
        cnt_ref[...] = jnp.zeros_like(cnt_ref)

    thr = thr_ref[0]
    lo = loss_ref[0]                                      # (1, TL)
    sel = (lo > thr).astype(jnp.float32)                  # sentinel (-1) excluded
    sum_ref[...] += jnp.sum(lo * sel)
    cnt_ref[...] += jnp.sum(sel)


def _ohem_masked_mean(loss, loss_thr, TL, G):
    """mean(loss[loss > loss_thr]); NaN if the selected set is empty."""
    N = loss.shape[0]
    thr = jnp.asarray(loss_thr, jnp.float32).reshape((1,))

    psum, pcnt = pl.pallas_call(
        ohem_partial_kernel,
        out_shape=(jax.ShapeDtypeStruct((N, 1, 128), jnp.float32),
                   jax.ShapeDtypeStruct((N, 1, 128), jnp.float32)),
        grid_spec=pltpu.PrefetchScalarGridSpec(
            num_scalar_prefetch=1,
            grid=(N, G),
            in_specs=[pl.BlockSpec((1, 1, TL), lambda n, j, thr: (n, 0, j))],
            out_specs=(pl.BlockSpec((1, 1, 128), lambda n, j, thr: (n, 0, 0)),
                       pl.BlockSpec((1, 1, 128), lambda n, j, thr: (n, 0, 0)))),
        compiler_params=pltpu.CompilerParams(
            dimension_semantics=("parallel", "arbitrary")),
    )(thr, loss)
    # Tiny final reduction (N scalars) in plain JAX.
    return jnp.sum(psum[:, 0, 0]) / jnp.sum(pcnt[:, 0, 0])


# ----------------------------------------------------------------------------
# The module.
# ----------------------------------------------------------------------------
class OhemCrossEntropy:
    """No learnable parameters (weight=None); matches the PyTorch forward."""

    def __init__(self, ignore_label=-1, thres=0.7, min_kept=100000, weight=None):
        self.thresh = float(thres)
        assert 0.0 < self.thresh < 1.0
        self.min_kept = max(1, min_kept)
        self.ignore_label = int(ignore_label)
        # TODO(synk): per-class `weight` not supported (module default is None).
        self.weight = weight
        # Pixels per grid block: the main kernel-1 perf knob.  16384 keeps the
        # double-buffered working set well under default scoped-VMEM on all
        # generations (v5e incl.); bump to 32768+ on v6e/v7x if desired (set
        # vmem_limit_bytes / pl.Buffered(3) on the logits spec only if the DMA
        # is still exposed after that).
        self.tile_lanes = 16384

    def _ce_forward(self, score, target):
        N, C, H, W = score.shape
        loss, _, _, _ = _per_pixel_ce_loss(score, target, self.ignore_label,
                                           self.tile_lanes, with_hist=False)
        return loss[:, 0, :H * W].reshape(N, H, W)   # reduction='none' loss map

    def _ohem_forward(self, score, target, **kwargs):
        N, C, H, W = score.shape
        loss, hist_blocks, TL, G = _per_pixel_ce_loss(
            score, target, self.ignore_label, self.tile_lanes,
            with_hist=True, thresh=self.thresh)

        t = -math.log(self.thresh)
        bin_w = t / (_NBINS - 1)

        # Global histogram + CDF -> loss-space threshold (replaces top_k with
        # K ~= min_kept+1 over all pixels).
        hist = hist_blocks[:, :, 0].astype(jnp.int32).sum(axis=0)   # (_NBINS,)
        n_valid = jnp.sum(hist)
        k = jnp.maximum(jnp.minimum(self.min_kept, n_valid - 1), 0)
        counts_ge = jnp.cumsum(hist[::-1])[::-1]   # counts_ge[b] = #{loss >= b*bin_w}
        b_sel = jnp.maximum(jnp.sum((counts_ge >= k + 1).astype(jnp.int32)) - 1, 0)
        # loss_thr = min(k-th largest valid loss, -log(thresh)).  Exact when
        # >= min_kept+1 valid pixels fall below `thresh` (b_sel == _NBINS-1);
        # otherwise approximated from below within one bin (~t/_NBINS).
        # TODO(synk): an extra refinement pass over the selected bin would make
        # the rare approximated case exact as well.
        loss_thr = jnp.minimum(b_sel.astype(jnp.float32) * bin_w, jnp.float32(t))

        # NOTE: if n_valid == 0 the selected set is empty and the result is
        # NaN (0/0), matching torch.mean of an empty tensor.
        return _ohem_masked_mean(loss, loss_thr, TL, G)

    def forward(self, score, target):
        if not (isinstance(score, list) or isinstance(score, tuple)):
            score = [score]
        balance_weights = config.LOSS.BALANCE_WEIGHTS
        sb_weights = config.LOSS.SB_WEIGHTS
        if len(balance_weights) == len(score):
            functions = [self._ce_forward] * (len(balance_weights) - 1) + [self._ohem_forward]
            return sum([w * func(x, target)
                        for (w, x, func) in zip(balance_weights, score, functions)])
        elif len(score) == 1:
            return sb_weights * self._ohem_forward(score[0], target)
        else:
            raise ValueError("lengths of prediction and target are not identical!")

    __call__ = forward


# ----------------------------------------------------------------------------
# Plain-JAX references (small-shape sanity checks only).
# ----------------------------------------------------------------------------
def _ref_ce_map(score, target, ignore_label):
    logp = jax.nn.log_softmax(score.astype(jnp.float32), axis=1)
    tgt = jnp.where(target == ignore_label, 0, target)
    nll = -jnp.take_along_axis(logp, tgt[:, None, :, :], axis=1)[:, 0]
    return jnp.where(target == ignore_label, 0.0, nll)


def _ref_ohem(score, target, ignore_label, thresh, min_kept):
    nll = _ref_ce_map(score, target, ignore_label).reshape(-1)
    valid = (target != ignore_label).reshape(-1)
    prob = jnp.exp(-nll)
    probs_sorted = jnp.sort(jnp.where(valid, prob, jnp.inf))
    n_valid = jnp.sum(valid)
    k = jnp.minimum(min_kept, n_valid - 1)
    min_value = probs_sorted[k]
    threshold = jnp.maximum(min_value, thresh)
    sel = valid & (prob < threshold)
    return jnp.sum(jnp.where(sel, nll, 0.0)) / jnp.sum(sel)


# ----------------------------------------------------------------------------
if __name__ == "__main__":
    key = jax.random.PRNGKey(0)
    k1, k2, k3, k4 = jax.random.split(key, 4)

    N, C, H, W = 2, 4, 16, 16
    score = jax.random.normal(k1, (N, C, H, W), dtype=jnp.float32)      # NCHW logits
    score_aux = jax.random.normal(k4, (N, C, H, W), dtype=jnp.float32)  # aux head logits
    target = jax.random.randint(k2, (N, H, W), 0, C, dtype=jnp.int32)
    ignore_mask = jax.random.uniform(k3, (N, H, W)) < 0.1
    target = jnp.where(ignore_mask, -1, target)                         # some ignored pixels

    criterion = OhemCrossEntropy(ignore_label=-1, thres=0.7, min_kept=50)

    # Single-head call -> sb_weights * OHEM scalar.
    out1 = jax.block_until_ready(jax.jit(criterion.forward)(score, target))
    assert out1.shape == () and bool(jnp.isfinite(out1))

    # Two-head call (BALANCE_WEIGHTS path): 0.4 * CE map + 1.0 * OHEM scalar
    # (broadcasting sum mirrors the PyTorch reference).
    out2 = jax.block_until_ready(jax.jit(criterion.forward)([score_aux, score], target))
    assert out2.shape == (N, H, W) and bool(jnp.all(jnp.isfinite(out2)))

    # Sanity checks against a plain-JAX reference.
    ref1 = _ref_ohem(score, target, -1, 0.7, 50)
    assert bool(jnp.allclose(out1, ref1, rtol=2e-2, atol=1e-4)), (out1, ref1)
    ce_map = criterion._ce_forward(score_aux, target)
    ref_map = _ref_ce_map(score_aux, target, -1)
    assert bool(jnp.allclose(ce_map, ref_map, rtol=1e-3, atol=1e-4))

    print("KERNEL_OK")
</pallas_src>

<mosaic_0001>
module attributes {stable_mosaic.version = 11 : i64} {
  func.func @ce_ohem_kernel(%arg0: i32, %arg1: i32, %arg2: memref<1x4x256xf32, #tpu.memory_space<vmem>>, %arg3: memref<1x1x256xi32, #tpu.memory_space<vmem>>, %arg4: memref<1x1x256xf32, #tpu.memory_space<vmem>>, %arg5: memref<1x128x1xf32, #tpu.memory_space<vmem>>, %arg6: memref<1x256xi32, #tpu.memory_space<vmem>>) attributes {dimension_semantics = [#tpu.dimension_semantics<parallel>, #tpu.dimension_semantics<parallel>], iteration_bounds = array<i64: 2, 1>, scalar_prefetch = 0 : i64, scratch_operands = 1 : i64, tpu.core_type = #tpu.core_type<tc>, window_params = [{transform_indices = @transform_0, window_bounds = array<i64: 1, 4, 256>}, {transform_indices = @transform_1, window_bounds = array<i64: 1, 1, 256>}, {transform_indices = @transform_2, window_bounds = array<i64: 1, 1, 256>}, {transform_indices = @transform_3, window_bounds = array<i64: 1, 128, 1>}]} {
    %c0 = arith.constant 0 : index
    %c0_0 = arith.constant 0 : index
    %c0_1 = arith.constant 0 : index
    %0 = vector.load %arg2[%c0, %c0_0, %c0_1] : memref<1x4x256xf32, #tpu.memory_space<vmem>>, vector<1x4x256xf32>
    %1 = vector.shape_cast %0 : vector<1x4x256xf32> to vector<4x256xf32>
    %c0_2 = arith.constant 0 : index
    %c0_3 = arith.constant 0 : index
    %c0_4 = arith.constant 0 : index
    %2 = vector.load %arg3[%c0_2, %c0_3, %c0_4] : memref<1x1x256xi32, #tpu.memory_space<vmem>>, vector<1x1x256xi32>
    %3 = vector.shape_cast %2 : vector<1x1x256xi32> to vector<1x256xi32>
    %4 = tpu.iota {dimensions = array<i32: 1>} : vector<1x256xi32>
    %c256_i32 = arith.constant 256 : i32
    %5 = arith.muli %arg1, %c256_i32 : i32
    %6 = vector.broadcast %5 : i32 to vector<1x256xi32>
    %7 = arith.addi %6, %4 : vector<1x256xi32>
    %c256_i32_5 = arith.constant 256 : i32
    %8 = vector.broadcast %c256_i32_5 : i32 to vector<1x256xi32>
    %9 = arith.cmpi slt, %7, %8 : vector<1x256xi32>
    %c-1_i32 = arith.constant -1 : i32
    %10 = vector.broadcast %c-1_i32 : i32 to vector<1x256xi32>
    %11 = arith.cmpi ne, %3, %10 : vector<1x256xi32>
    %12 = arith.andi %11, %9 : vector<1x256xi1>
    %c0_i32 = arith.constant 0 : i32
    %13 = vector.broadcast %c0_i32 : i32 to vector<1x256xi32>
    %14 = arith.select %12, %3, %13 : vector<1x256xi1>, vector<1x256xi32>
    %cst = arith.constant dense<0xFF800000> : vector<256xf32>
    %15 = vector.multi_reduction <maximumf>, %1, %cst [0] : vector<4x256xf32> to vector<256xf32>
    %16 = vector.shape_cast %15 : vector<256xf32> to vector<1x256xf32>
    %17 = vector.broadcast %16 : vector<1x256xf32> to vector<4x256xf32>
    %18 = arith.subf %1, %17 : vector<4x256xf32>
    %19 = math.exp %18 : vector<4x256xf32>
    %cst_6 = arith.constant dense<0.000000e+00> : vector<256xf32>
    %20 = vector.multi_reduction <add>, %19, %cst_6 [0] : vector<4x256xf32> to vector<256xf32>
    %21 = vector.shape_cast %20 : vector<256xf32> to vector<1x256xf32>
    %22 = math.log %21 : vector<1x256xf32>
    %23 = arith.addf %22, %16 : vector<1x256xf32>
    %24 = tpu.iota {dimensions = array<i32: 0>} : vector<4x256xi32>
    %25 = vector.broadcast %14 : vector<1x256xi32> to vector<4x256xi32>
    %26 = arith.cmpi eq, %24, %25 : vector<4x256xi32>
    %27 = arith.extui %26 : vector<4x256xi1> to vector<4x256xi32>
    %28 = arith.sitofp %27 : vector<4x256xi32> to vector<4x256xf32>
    %29 = arith.mulf %1, %28 : vector<4x256xf32>
    %cst_7 = arith.constant dense<0.000000e+00> : vector<256xf32>
    %30 = vector.multi_reduction <add>, %29, %cst_7 [0] : vector<4x256xf32> to vector<256xf32>
    %31 = vector.shape_cast %30 : vector<256xf32> to vector<1x256xf32>
    %32 = arith.subf %23, %31 : vector<1x256xf32>
    %cst_8 = arith.constant -1.000000e+00 : f32
    %33 = vector.broadcast %cst_8 : f32 to vector<1x256xf32>
    %34 = arith.select %12, %32, %33 : vector<1x256xi1>, vector<1x256xf32>
    %c0_9 = arith.constant 0 : index
    %c0_10 = arith.constant 0 : index
    %c0_11 = arith.constant 0 : index
    %35 = vector.load %arg4[%c0_9, %c0_10, %c0_11] : memref<1x1x256xf32, #tpu.memory_space<vmem>>, vector<1x1x256xf32>
    %36 = vector.shape_cast %35 : vector<1x1x256xf32> to vector<1x256xf32>
    %37 = vector.shape_cast %34 : vector<1x256xf32> to vector<1x1x256xf32>
    tpu.vector_store %arg4[%c0_9, %c0_10, %c0_11], %37 {strides = array<i32>} : memref<1x1x256xf32, #tpu.memory_space<vmem>>, vector<1x1x256xf32>,
    %cst_12 = arith.constant 356.066498 : f32
    %38 = vector.broadcast %cst_12 : f32 to vector<1x256xf32>
    %39 = arith.mulf %32, %38 : vector<1x256xf32>
    %40 = math.floor %39 : vector<1x256xf32>
    %41 = arith.fptosi %40 : vector<1x256xf32> to vector<1x256xi32>
    %c0_i32_13 = arith.constant 0 : i32
    %c127_i32 = arith.constant 127 : i32
    %42 = vector.broadcast %c0_i32_13 : i32 to vector<1x256xi32>
    %43 = arith.maxsi %42, %41 : vector<1x256xi32>
    %44 = vector.broadcast %c127_i32 : i32 to vector<1x256xi32>
    %45 = arith.minsi %44, %43 : vector<1x256xi32>
    %c-1_i32_14 = arith.constant -1 : i32
    %46 = vector.broadcast %c-1_i32_14 : i32 to vector<1x256xi32>
    %47 = arith.select %12, %45, %46 : vector<1x256xi1>, vector<1x256xi32>
    %c0_15 = arith.constant 0 : index
    %c0_16 = arith.constant 0 : index
    %48 = vector.load %arg6[%c0_15, %c0_16] : memref<1x256xi32, #tpu.memory_space<vmem>>, vector<1x256xi32>
    tpu.vector_store %arg6[%c0_15, %c0_16], %47 {strides = array<i32>} : memref<1x256xi32, #tpu.memory_space<vmem>>, vector<1x256xi32>,
    %49 = tpu.iota {dimensions = array<i32: 0>} : vector<128x1xi32>
    %cst_17 = arith.constant 0.000000e+00 : f32
    %50 = vector.broadcast %cst_17 : f32 to vector<128x128xf32>
    %c0_i32_18 = arith.constant 0 : i32
    %c256_i32_19 = arith.constant 256 : i32
    %51 = arith.muli %c0_i32_18, %c256_i32_19 : i32
    %52 = tpu.assume_multiple %51, 256 : i32
    %c0_20 = arith.constant 0 : index
    %53 = arith.index_cast %52 : i32 to index
    %54 = vector.load %arg6[%c0_20, %53] : memref<1x256xi32, #tpu.memory_space<vmem>>, vector<1x256xi32>
    %55 = vector.broadcast %54 : vector<1x256xi32> to vector<128x256xi32>
    %56 = vector.broadcast %49 : vector<128x1xi32> to vector<128x256xi32>
    %57 = arith.cmpi eq, %55, %56 : vector<128x256xi32>
    %58 = arith.extui %57 : vector<128x256xi1> to vector<128x256xi32>
    %59 = arith.sitofp %58 : vector<128x256xi32> to vector<128x256xf32>
    %60 = vector.extract_strided_slice %59 {offsets = [0, 0], sizes = [128, 128], strides = [1, 1]} : vector<128x256xf32> to vector<128x128xf32>
    %61 = vector.extract_strided_slice %59 {offsets = [0, 128], sizes = [128, 128], strides = [1, 1]} : vector<128x256xf32> to vector<128x128xf32>
    %62 = arith.addf %60, %61 : vector<128x128xf32>
    %63 = arith.addf %50, %62 : vector<128x128xf32>
    %c1_i32 = arith.constant 1 : i32
    %cst_21 = arith.constant dense<0.000000e+00> : vector<128xf32>
    %64 = vector.multi_reduction <add>, %63, %cst_21 [1] : vector<128x128xf32> to vector<128xf32>
    %65 = vector.shape_cast %64 : vector<128xf32> to vector<128x1xf32>
    %c0_22 = arith.constant 0 : index
    %c0_23 = arith.constant 0 : index
    %c0_24 = arith.constant 0 : index
    %66 = vector.load %arg5[%c0_22, %c0_23, %c0_24] : memref<1x128x1xf32, #tpu.memory_space<vmem>>, vector<1x128x1xf32>
    %67 = vector.shape_cast %66 : vector<1x128x1xf32> to vector<128x1xf32>
    %68 = vector.shape_cast %65 : vector<128x1xf32> to vector<1x128x1xf32>
    tpu.vector_store %arg5[%c0_22, %c0_23, %c0_24], %68 {strides = array<i32>} : memref<1x128x1xf32, #tpu.memory_space<vmem>>, vector<1x128x1xf32>,
    return
  }
  func.func @transform_0(%arg0: i32, %arg1: i32) -> (i32, i32, i32) {
    %c0_i32 = arith.constant 0 : i32
    %c0_i32_0 = arith.constant 0 : i32
    return %arg0, %c0_i32, %arg1 : i32, i32, i32
  }
  func.func @transform_1(%arg0: i32, %arg1: i32) -> (i32, i32, i32) {
    %c0_i32 = arith.constant 0 : i32
    %c0_i32_0 = arith.constant 0 : i32
    return %arg0, %c0_i32, %arg1 : i32, i32, i32
  }
  func.func @transform_2(%arg0: i32, %arg1: i32) -> (i32, i32, i32) {
    %c0_i32 = arith.constant 0 : i32
    %c0_i32_0 = arith.constant 0 : i32
    return %arg0, %c0_i32, %arg1 : i32, i32, i32
  }
  func.func @transform_3(%arg0: i32, %arg1: i32) -> (i32, i32, i32) {
    %c1_i32 = arith.constant 1 : i32
    %0 = arith.muli %arg0, %c1_i32 : i32
    %1 = arith.addi %0, %arg1 : i32
    %c0_i32 = arith.constant 0 : i32
    %c0_i32_0 = arith.constant 0 : i32
    %c0_i32_1 = arith.constant 0 : i32
    return %1, %c0_i32, %c0_i32_0 : i32, i32, i32
  }
}

module attributes {stable_mosaic.version = 11 : i64} {
  func.func @ohem_partial_kernel(%arg0: i32, %arg1: i32, %arg2: memref<1xf32, #tpu.memory_space<smem>>, %arg3: memref<1x1x256xf32, #tpu.memory_space<vmem>>, %arg4: memref<1x1x128xf32, #tpu.memory_space<vmem>>, %arg5: memref<1x1x128xf32, #tpu.memory_space<vmem>>) attributes {dimension_semantics = [#tpu.dimension_semantics<parallel>, #tpu.dimension_semantics<arbitrary>], iteration_bounds = array<i64: 2, 1>, scalar_prefetch = 1 : i64, scratch_operands = 0 : i64, tpu.core_type = #tpu.core_type<tc>, window_params = [{transform_indices = @transform_0, window_bounds = array<i64: 1, 1, 256>}, {transform_indices = @transform_1, window_bounds = array<i64: 1, 1, 128>}, {transform_indices = @transform_2, window_bounds = array<i64: 1, 1, 128>}]} {
    %c0_i32 = arith.constant 0 : i32
    %0 = arith.cmpi eq, %arg1, %c0_i32 : i32
    %1 = arith.extui %0 : i1 to i32
    %c0_i32_0 = arith.constant 0 : i32
    %2 = arith.cmpi ne, %1, %c0_i32_0 : i32
    scf.if %2 {
      %cst_17 = arith.constant 0.000000e+00 : f32
      %27 = vector.broadcast %cst_17 : f32 to vector<1x1x128xf32>
      %c0_18 = arith.constant 0 : index
      %c0_19 = arith.constant 0 : index
      %c0_20 = arith.constant 0 : index
      %28 = vector.load %arg4[%c0_18, %c0_19, %c0_20] : memref<1x1x128xf32, #tpu.memory_space<vmem>>, vector<1x1x128xf32>
      tpu.vector_store %arg4[%c0_18, %c0_19, %c0_20], %27 {strides = array<i32>} : memref<1x1x128xf32, #tpu.memory_space<vmem>>, vector<1x1x128xf32>,
      %cst_21 = arith.constant 0.000000e+00 : f32
      %29 = vector.broadcast %cst_21 : f32 to vector<1x1x128xf32>
      %c0_22 = arith.constant 0 : index
      %c0_23 = arith.constant 0 : index
      %c0_24 = arith.constant 0 : index
      %30 = vector.load %arg5[%c0_22, %c0_23, %c0_24] : memref<1x1x128xf32, #tpu.memory_space<vmem>>, vector<1x1x128xf32>
      tpu.vector_store %arg5[%c0_22, %c0_23, %c0_24], %29 {strides = array<i32>} : memref<1x1x128xf32, #tpu.memory_space<vmem>>, vector<1x1x128xf32>,
    } else {
    }
    %c0 = arith.constant 0 : index
    %3 = memref.load %arg2[%c0] : memref<1xf32, #tpu.memory_space<smem>>
    %c0_1 = arith.constant 0 : index
    %c0_2 = arith.constant 0 : index
    %c0_3 = arith.constant 0 : index
    %4 = vector.load %arg3[%c0_1, %c0_2, %c0_3] : memref<1x1x256xf32, #tpu.memory_space<vmem>>, vector<1x1x256xf32>
    %5 = vector.shape_cast %4 : vector<1x1x256xf32> to vector<1x256xf32>
    %6 = vector.broadcast %3 : f32 to vector<1x256xf32>
    %7 = arith.cmpf ogt, %5, %6 : vector<1x256xf32>
    %8 = arith.extui %7 : vector<1x256xi1> to vector<1x256xi32>
    %9 = arith.sitofp %8 : vector<1x256xi32> to vector<1x256xf32>
    %c0_4 = arith.constant 0 : index
    %c0_5 = arith.constant 0 : index
    %c0_6 = arith.constant 0 : index
    %10 = vector.load %arg4[%c0_4, %c0_5, %c0_6] : memref<1x1x128xf32, #tpu.memory_space<vmem>>, vector<1x1x128xf32>
    %11 = arith.mulf %5, %9 : vector<1x256xf32>
    %12 = vector.shape_cast %11 : vector<1x256xf32> to vector<1x1x256xf32>
    %cst = arith.constant dense<0.000000e+00> : vector<1xf32>
    %13 = vector.multi_reduction <add>, %12, %cst [1, 2] : vector<1x1x256xf32> to vector<1xf32>
    %14 = vector.shape_cast %13 : vector<1xf32> to vector<1x1x1xf32>
    %15 = vector.extract %14[0, 0, 0] : f32 from vector<1x1x1xf32>
    %16 = vector.broadcast %15 : f32 to vector<1x1x128xf32>
    %17 = arith.addf %10, %16 : vector<1x1x128xf32>
    %c0_7 = arith.constant 0 : index
    %c0_8 = arith.constant 0 : index
    %c0_9 = arith.constant 0 : index
    %18 = vector.load %arg4[%c0_7, %c0_8, %c0_9] : memref<1x1x128xf32, #tpu.memory_space<vmem>>, vector<1x1x128xf32>
    tpu.vector_store %arg4[%c0_7, %c0_8, %c0_9], %17 {strides = array<i32>} : memref<1x1x128xf32, #tpu.memory_space<vmem>>, vector<1x1x128xf32>,
    %c0_10 = arith.constant 0 : index
    %c0_11 = arith.constant 0 : index
    %c0_12 = arith.constant 0 : index
    %19 = vector.load %arg5[%c0_10, %c0_11, %c0_12] : memref<1x1x128xf32, #tpu.memory_space<vmem>>, vector<1x1x128xf32>
    %20 = vector.shape_cast %9 : vector<1x256xf32> to vector<1x1x256xf32>
    %cst_13 = arith.constant dense<0.000000e+00> : vector<1xf32>
    %21 = vector.multi_reduction <add>, %20, %cst_13 [1, 2] : vector<1x1x256xf32> to vector<1xf32>
    %22 = vector.shape_cast %21 : vector<1xf32> to vector<1x1x1xf32>
    %23 = vector.extract %22[0, 0, 0] : f32 from vector<1x1x1xf32>
    %24 = vector.broadcast %23 : f32 to vector<1x1x128xf32>
    %25 = arith.addf %19, %24 : vector<1x1x128xf32>
    %c0_14 = arith.constant 0 : index
    %c0_15 = arith.constant 0 : index
    %c0_16 = arith.constant 0 : index
    %26 = vector.load %arg5[%c0_14, %c0_15, %c0_16] : memref<1x1x128xf32, #tpu.memory_space<vmem>>, vector<1x1x128xf32>
    tpu.vector_store %arg5[%c0_14, %c0_15, %c0_16], %25 {strides = array<i32>} : memref<1x1x128xf32, #tpu.memory_space<vmem>>, vector<1x1x128xf32>,
    return
  }
  func.func @transform_0(%arg0: i32, %arg1: i32, %arg2: memref<1xf32, #tpu.memory_space<smem>>) -> (i32, i32, i32) {
    %c0_i32 = arith.constant 0 : i32
    %c0_i32_0 = arith.constant 0 : i32
    return %arg0, %c0_i32, %arg1 : i32, i32, i32
  }
  func.func @transform_1(%arg0: i32, %arg1: i32, %arg2: memref<1xf32, #tpu.memory_space<smem>>) -> (i32, i32, i32) {
    %c0_i32 = arith.constant 0 : i32
    %c0_i32_0 = arith.constant 0 : i32
    %c0_i32_1 = arith.constant 0 : i32
    return %arg0, %c0_i32, %c0_i32_0 : i32, i32, i32
  }
  func.func @transform_2(%arg0: i32, %arg1: i32, %arg2: memref<1xf32, #tpu.memory_space<smem>>) -> (i32, i32, i32) {
    %c0_i32 = arith.constant 0 : i32
    %c0_i32_0 = arith.constant 0 : i32
    %c0_i32_1 = arith.constant 0 : i32
    return %arg0, %c0_i32, %c0_i32_0 : i32, i32, i32
  }
}

</mosaic_0001>

<llo_original>
// kernel: forward.3
$region0: #{forward.3}
  #allocation0 [shape = 'u32[]', space=smem, size = 0x4, offset = 0x4, fixed_abs, tag = 'smem constant byte address 0x4 - core index']
  #allocation1 [shape = 'u32[144,128]{1,0:T(1,128)}', space=vmem, size = 0x12000, scoped, tag = 'internal scratch']
  #allocation2 [shape = 's32[1]{0}', space=sflag, size = 0x4, scoped, tag = 'scoped memory for forward.3']
  #allocation3 [shape = 'f32[1]{0:T(128)S(6)}', space=smem, size = 0x200, scoped, tag = 'prefetched SMEM operand 0']
  %s0 = inlined_call_operand.<no memory space> [shape: f32[1], index: 0, kind: input, shape index: {}]
  %s1 = inlined_call_operand.vmem [shape: f32[2,1,256], index: 1, kind: input, shape index: {}]
  %s2 = inlined_call_operand.vmem [shape: f32[2,1,128], index: 2, kind: output, shape index: {0}]
  %s3 = inlined_call_operand.vmem [shape: f32[2,1,128], index: 3, kind: output, shape index: {1}]
  %4 = xla_tuple %s2, %s3
  %s5 = sld [smem:[#allocation0]]
  $region49: #{forward.3} parent=0
    _
  %s7 = ssub.s32 1, %s5
  %s8 = scalar_select 0, %s7, %s5
  %9 = sst [smem:[#allocation3]] %s0
  loop: start=0, step=1, limit=4
  $region2: #{forward.3} parent=0 // loop_pre_header
    _
  $region3: #{forward.3} parent=0 // loop_header
    %s11 = sphi 0, %s15
    %p12 = scmp.ge.s32.totalorder %s11, 4
    %s18 = sphi 0, %s30
    %s19 = sphi 0, %s26
    %s20 = sphi 0, %s18
    %s21 = sphi 0, %s19
    %s22 = sphi 0, %s20
    %s23 = sphi 0, %s21
    %s35 = sphi 0, %s37
    %s38 = sphi 0, %s35
    %s39 = sphi 0, %s38
    %s55 = sphi 0, %s39
    %s61 = sphi 0, %s63
    %s64 = sphi 0, %s61
    %s65 = sphi 0, %s64
    %s81 = sphi 0, %s65
    %s87 = sphi 0, %s89
    %s90 = sphi 0, %s87
    %s91 = sphi 0, %s90
    %s107 = sphi 0, %s91
  $region4: #{forward.3} parent=0 // loop_header_branch
    %14 = sbr.rel (%p12) target = $region8
  $region5: #{forward.3} parent=0 // loop_body
    %s16 = ssub.s32 %s11, 1
    %s17 = ssub.s32 %s11, 2
    %s24 = sadd.s32 1, %s19
    %p25 = scmp.ge.s32.totalorder %s24, 1
    %s26 = scalar_select %p25, 0, %s24
    %s27 = sadd.s32 1, %s18
    %s28 = scalar_select %p25, %s27, %s18
    %p29 = scmp.ge.s32.totalorder %s28, 2
    %s30 = scalar_select %p29, 0, %s28
    %s31 = ssub.s32 %s18, %s30
    %s32 = ssub.s32 %s19, %s26
    %s33 = sor.u32 %s31, %s32
    %p34 = scmp.eq.s32.totalorder %s33, 0
    %s36 = sadd.s32 %s35, 1
    %s37 = scalar_select %p34, %s35, %s36
    %p40 = pneg %p34
    %p41 = scmp.eq.s32.totalorder %s11, 1
    %p42 = por %p40, %p41
    %p43 = scmp.ne.s32.totalorder %s35, %s38
    %p44 = scmp.eq.s32.totalorder %s11, 0
    %p45 = por %p43, %p44
    %p46 = scmp.ne.s32.totalorder %s35, %s38
    %p47 = scmp.eq.s32.totalorder %s16, 1
    %p48 = por %p46, %p47
    %p49 = scmp.ne.s32.totalorder %s38, %s39
    %p50 = scmp.eq.s32.totalorder %s16, 0
    %p51 = por %p49, %p50
    %p52 = scmp.ne.s32.totalorder %s38, %s39
    %p53 = scmp.eq.s32.totalorder %s17, 1
    %p54 = por %p52, %p53
    %p56 = scmp.ne.s32.totalorder %s39, %s55
    %p57 = scmp.eq.s32.totalorder %s17, 0
    %p58 = por %p56, %p57
    %s59 = ssub.s32 %s18, %s30
    %p60 = scmp.eq.s32.totalorder %s59, 0
    %s62 = sadd.s32 %s61, 1
    %s63 = scalar_select %p60, %s61, %s62
    %p66 = pneg %p60
    %p67 = scmp.eq.s32.totalorder %s11, 1
    %p68 = por %p66, %p67
    %p69 = scmp.ne.s32.totalorder %s61, %s64
    %p70 = scmp.eq.s32.totalorder %s11, 0
    %p71 = por %p69, %p70
    %p72 = scmp.ne.s32.totalorder %s61, %s64
    %p73 = scmp.eq.s32.totalorder %s16, 1
    %p74 = por %p72, %p73
    %p75 = scmp.ne.s32.totalorder %s64, %s65
    %p76 = scmp.eq.s32.totalorder %s16, 0
    %p77 = por %p75, %p76
    %p78 = scmp.ne.s32.totalorder %s64, %s65
    %p79 = scmp.eq.s32.totalorder %s17, 1
    %p80 = por %p78, %p79
    %p82 = scmp.ne.s32.totalorder %s65, %s81
    %p83 = scmp.eq.s32.totalorder %s17, 0
    %p84 = por %p82, %p83
    %s85 = ssub.s32 %s18, %s30
    %p86 = scmp.eq.s32.totalorder %s85, 0
    %s88 = sadd.s32 %s87, 1
    %s89 = scalar_select %p86, %s87, %s88
    %p92 = pneg %p86
    %p93 = scmp.eq.s32.totalorder %s11, 1
    %p94 = por %p92, %p93
    %p95 = scmp.ne.s32.totalorder %s87, %s90
    %p96 = scmp.eq.s32.totalorder %s11, 0
    %p97 = por %p95, %p96
    %p98 = scmp.ne.s32.totalorder %s87, %s90
    %p99 = scmp.eq.s32.totalorder %s16, 1
    %p100 = por %p98, %p99
    %p101 = scmp.ne.s32.totalorder %s90, %s91
    %p102 = scmp.eq.s32.totalorder %s16, 0
    %p103 = por %p101, %p102
    %p104 = scmp.ne.s32.totalorder %s90, %s91
    %p105 = scmp.eq.s32.totalorder %s17, 1
    %p106 = por %p104, %p105
    %p108 = scmp.ne.s32.totalorder %s91, %s107
    %p109 = scmp.eq.s32.totalorder %s17, 0
    %p110 = por %p108, %p109
    %p111 = scmp.le.s32.totalorder 1, %s11
    %p112 = scmp.lt.s32.totalorder %s11, 3
    %p113 = pnand %p111, %p112
    %p114 = pneg %p113
    // Predicated region
    $region9: #{forward.3} parent=5 // pred_check
      _
    $region10: #{forward.3} parent=5 // pred_check_branch
      %116 = sbr.rel (%p113) target = $region12
    $region11: #{forward.3} parent=5 // pred_region
      %s117 = ssub.s32 %s11, 1
    $region12: #{forward.3} parent=5 // pred_fallthru
      _
    %p118 = scmp.lt.s32.totalorder %s11, 2
    // Predicated region
    $region13: #{forward.3} parent=5 // pred_check
      %p119 = pneg %p118
    $region14: #{forward.3} parent=5 // pred_check_branch
      %121 = sbr.rel (%p119) target = $region16
    $region15: #{forward.3} parent=5 // pred_region
      // Predicated region
      $region17: #{forward.3} parent=15 // pred_check
        %p122 = pneg %p45
      $region18: #{forward.3} parent=15 // pred_check_branch
        %124 = sbr.rel (%p122) target = $region20
      $region19: #{forward.3} parent=15 // pred_region
        %s125 = smul.u32 2, %s19
        %p126 = scmp.lt.s32.totalorder %s18, 1
        %s127 = scalar_select %p126, %s18, 1
        %p128 = scmp.lt.s32.totalorder %s125, 1
        %s129 = scalar_select %p128, %s125, 1
        %s130 = smul.addr %s127, 2
        %s131 = sadd.s32 %s129, %s130
        %s132 = scalar_lea.vmem %s1, %s131
        %s133 = smul.u32 2, %s19
      $region20: #{forward.3} parent=15 // pred_fallthru
        _
    $region16: #{forward.3} parent=5 // pred_fallthru
      _
    %p134 = scmp.le.s32.totalorder 1, %s11
    %p135 = scmp.lt.s32.totalorder %s11, 3
    %p136 = pnand %p134, %p135
    %p137 = pneg %p136
    // Predicated region
    $region21: #{forward.3} parent=5 // pred_check
      _
    $region22: #{forward.3} parent=5 // pred_check_branch
      %139 = sbr.rel (%p136) target = $region24
    $region23: #{forward.3} parent=5 // pred_region
      %s140 = ssub.s32 %s11, 1
      %s141 = smul.u32 2, %s21
      %p142 = scmp.lt.s32.totalorder %s20, 1
      %s143 = scalar_select %p142, %s20, 1
      %p144 = scmp.lt.s32.totalorder %s141, 1
      %s145 = scalar_select %p144, %s141, 1
      %s146 = smul.addr %s143, 2
      %s147 = sadd.s32 %s145, %s146
      %s148 = scalar_lea.vmem %s1, %s147
      %p149 = pneg %p51
      %p150 = pneg %p48
      %p151 = pneg %p77
      %p152 = pneg %p74
      %p153 = scmp.lt.s32.totalorder %s20, 1
      %s154 = scalar_select %p153, %s20, 1
      %s155 = scalar_lea.vmem %s2, %s154
      %p156 = pneg %p103
      %p157 = pneg %p100
      %p158 = scmp.lt.s32.totalorder %s20, 1
      %s159 = scalar_select %p158, %s20, 1
      %s160 = scalar_lea.vmem %s3, %s159
      %s161 = smul.u32 2, %s21
      %p162 = scmp.lt.s32.totalorder %s20, 1
      %s163 = scalar_select %p162, %s20, 1
      %p164 = scmp.lt.s32.totalorder %s161, 1
      %s165 = scalar_select %p164, %s161, 1
      %s166 = smul.addr %s163, 2
      %s167 = sadd.s32 %s165, %s166
      %s168 = scalar_lea.vmem %s1, %s167
      %s169 = smul.u32 2, %s21
      %p170 = scmp.lt.s32.totalorder %s20, 1
      %s171 = scalar_select %p170, %s20, 1
      %s172 = scalar_lea.vmem %s2, %s171
      %p173 = scmp.lt.s32.totalorder %s20, 1
      %s174 = scalar_select %p173, %s20, 1
      %s175 = scalar_lea.vmem %s3, %s174
      %p176 = scmp.eq.s32.totalorder %s21, 0
      // Predicated region
      $region25: #{forward.3} parent=23 // pred_check
        %p177 = pneg %p176
      $region26: #{forward.3} parent=23 // pred_check_branch
        %179 = sbr.rel (%p177) target = $region28
      $region27: #{forward.3} parent=23 // pred_region
        %180 = vst [vmem:[%s172] sm:$0x1] 0.0
        %181 = vst [vmem:[%s175] sm:$0x1] 0.0
      $region28: #{forward.3} parent=23 // pred_fallthru
        _
      %s182 = sld [smem:[#allocation3]]
      %v183 = vld [vmem:[%s168] sm:$0x3]
      %v184 = vstv %s182
      %vm185 = vcmp.gt.f32.partialorder %v183, %v184
      %v186 = vsel %vm185, 1, 0
      %v187 = vcvt.s32.f32 %v186
      %v188 = vld [vmem:[%s172] sm:$0x1]
      %v189 = vmul.f32 %v183, %v187
      %v191 = vlaneseq
      %v192 = vshrl.u32 %v191, 7
      %v193 = vsub.s32 0, %v192
      %v194 = vrot.slane %v189, %v193
      %v195 = vlaneseq
      %v196 = vshrl.u32 %v195, 7
      %v197 = vsub.s32 1, %v196
      %v198 = vrot.slane %v189, %v197
      %vm201 = vcmask 1040384
      %v202 = vsel %vm201, %v194, 0.0
      %v203 = vsel %vm201, %v198, 0.0
      %v204 = vadd.f32 %v202, %v203
      %205 = vadd.xlane.f32.xlu0 %v204
      %v206 = vpop.xlane.xlu0 %205
      %v207 = vrot.slane %v206, 4
      %v208 = vadd.f32 %v206, %v207
      %v209 = vrot.slane %v208, 2
      %v210 = vadd.f32 %v208, %v209
      %v211 = vrot.slane %v210, 1
      %v212 = vadd.f32 %v210, %v211
      %s213 = vtos %v212
      %v214 = vstv %s213
      %v215 = vadd.f32 %v188, %v214
      %216 = vst [vmem:[%s172] sm:$0x1] %v215
      %v217 = vld [vmem:[%s175] sm:$0x1]
      %v219 = vlaneseq
      %v220 = vshrl.u32 %v219, 7
      %v221 = vsub.s32 0, %v220
      %v222 = vrot.slane %v187, %v221
      %v223 = vlaneseq
      %v224 = vshrl.u32 %v223, 7
      %v225 = vsub.s32 1, %v224
      %v226 = vrot.slane %v187, %v225
      %v229 = vsel %vm201, %v222, 0.0
      %v230 = vsel %vm201, %v226, 0.0
      %v231 = vadd.f32 %v229, %v230
      %232 = vadd.xlane.f32.xlu0 %v231
      %v233 = vpop.xlane.xlu0 %232
      %v234 = vrot.slane %v233, 4
      %v235 = vadd.f32 %v233, %v234
      %v236 = vrot.slane %v235, 2
      %v237 = vadd.f32 %v235, %v236
      %v238 = vrot.slane %v237, 1
      %v239 = vadd.f32 %v237, %v238
      %s240 = vtos %v239
      %v241 = vstv %s240
      %v242 = vadd.f32 %v217, %v241
      %243 = vst [vmem:[%s175] sm:$0x1] %v242
      %p244 = scmp.lt.s32.totalorder %s20, 1
      %s245 = scalar_select %p244, %s20, 1
      %s246 = scalar_lea.vmem %s2, %s245
      %p247 = scmp.lt.s32.totalorder %s20, 1
      %s248 = scalar_select %p247, %s20, 1
      %s249 = scalar_lea.vmem %s3, %s248
      // Predicated region
      $region29: #{forward.3} parent=23 // pred_check
        %p250 = pneg %p74
      $region30: #{forward.3} parent=23 // pred_check_branch
        %252 = sbr.rel (%p250) target = $region32
      $region31: #{forward.3} parent=23 // pred_region
        _
      $region32: #{forward.3} parent=23 // pred_fallthru
        _
      // Predicated region
      $region33: #{forward.3} parent=23 // pred_check
        %p253 = pneg %p100
      $region34: #{forward.3} parent=23 // pred_check_branch
        %255 = sbr.rel (%p253) target = $region36
      $region35: #{forward.3} parent=23 // pred_region
        _
      $region36: #{forward.3} parent=23 // pred_fallthru
        _
    $region24: #{forward.3} parent=5 // pred_fallthru
      _
    %p256 = scmp.le.s32.totalorder 2, %s11
    // Predicated region
    $region37: #{forward.3} parent=5 // pred_check
      %p257 = pneg %p256
    $region38: #{forward.3} parent=5 // pred_check_branch
      %259 = sbr.rel (%p257) target = $region40
    $region39: #{forward.3} parent=5 // pred_region
      %s260 = ssub.s32 %s11, 2
      // Predicated region
      $region41: #{forward.3} parent=39 // pred_check
        %p261 = pneg %p80
      $region42: #{forward.3} parent=39 // pred_check_branch
        %263 = sbr.rel (%p261) target = $region44
      $region43: #{forward.3} parent=39 // pred_region
        %p264 = scmp.lt.s32.totalorder %s22, 1
        %s265 = scalar_select %p264, %s22, 1
        %s266 = scalar_lea.vmem %s2, %s265
      $region44: #{forward.3} parent=39 // pred_fallthru
        _
      // Predicated region
      $region45: #{forward.3} parent=39 // pred_check
        %p267 = pneg %p106
      $region46: #{forward.3} parent=39 // pred_check_branch
        %269 = sbr.rel (%p267) target = $region48
      $region47: #{forward.3} parent=39 // pred_region
        %p270 = scmp.lt.s32.totalorder %s22, 1
        %s271 = scalar_select %p270, %s22, 1
        %s272 = scalar_lea.vmem %s3, %s271
      $region48: #{forward.3} parent=39 // pred_fallthru
        _
    $region40: #{forward.3} parent=5 // pred_fallthru
      _
  $region6: #{forward.3} parent=0 // loop_footer
    %s15 = sadd.s32 1, %s11
  $region7: #{forward.3} parent=0 // loop_footer_branch
    %10 = sbr.rel target = $region3
  $region8: #{forward.3} parent=0 // loop_exit
    _

// kernel: forward.2
$region0: #{forward.2}
  #allocation0 [shape = 'u32[]', space=smem, size = 0x4, offset = 0x4, fixed_abs, tag = 'smem constant byte address 0x4 - core index']
  #allocation1 [shape = 'u32[144,128]{1,0:T(1,128)}', space=vmem, size = 0x12000, scoped, tag = 'internal scratch']
  #allocation2 [shape = 's32[1,256]{1,0:T(1,128)}', space=vmem, size = 0x400, scoped, tag = 'scratch operand']
  %s0 = inlined_call_operand.vmem [shape: f32[2,4,256], index: 0, kind: input, shape index: {}]
  %s1 = inlined_call_operand.vmem [shape: s32[2,1,256], index: 1, kind: input, shape index: {}]
  %s2 = inlined_call_operand.vmem [shape: f32[2,1,256], index: 2, kind: output, shape index: {0}]
  %s3 = inlined_call_operand.vmem [shape: f32[2,128,1], index: 3, kind: output, shape index: {1}]
  %4 = xla_tuple %s2, %s3
  %s5 = sld [smem:[#allocation0]]
  $region49: #{forward.2} parent=0
    _
  %s7 = ssub.s32 1, %s5
  %s8 = scalar_select 0, %s7, %s5
  loop: start=0, step=1, limit=4
  $region2: #{forward.2} parent=0 // loop_pre_header
    _
  $region3: #{forward.2} parent=0 // loop_header
    %s10 = sphi 0, %s14
    %p11 = scmp.ge.s32.totalorder %s10, 4
    %s17 = sphi 0, %s29
    %s18 = sphi 0, %s25
    %s19 = sphi 0, %s17
    %s20 = sphi 0, %s18
    %s21 = sphi 0, %s19
    %s22 = sphi 0, %s20
    %s34 = sphi 0, %s36
    %s37 = sphi 0, %s34
    %s38 = sphi 0, %s37
    %s54 = sphi 0, %s38
    %s62 = sphi 0, %s64
    %s65 = sphi 0, %s62
    %s66 = sphi 0, %s65
    %s82 = sphi 0, %s66
    %s90 = sphi 0, %s92
    %s93 = sphi 0, %s90
    %s94 = sphi 0, %s93
    %s110 = sphi 0, %s94
    %s118 = sphi 0, %s120
    %s121 = sphi 0, %s118
    %s122 = sphi 0, %s121
    %s138 = sphi 0, %s122
  $region4: #{forward.2} parent=0 // loop_header_branch
    %13 = sbr.rel (%p11) target = $region8
  $region5: #{forward.2} parent=0 // loop_body
    %s15 = ssub.s32 %s10, 1
    %s16 = ssub.s32 %s10, 2
    %s23 = sadd.s32 1, %s18
    %p24 = scmp.ge.s32.totalorder %s23, 1
    %s25 = scalar_select %p24, 0, %s23
    %s26 = sadd.s32 1, %s17
    %s27 = scalar_select %p24, %s26, %s17
    %p28 = scmp.ge.s32.totalorder %s27, 2
    %s29 = scalar_select %p28, 0, %s27
    %s30 = ssub.s32 %s17, %s29
    %s31 = ssub.s32 %s18, %s25
    %s32 = sor.u32 %s30, %s31
    %p33 = scmp.eq.s32.totalorder %s32, 0
    %s35 = sadd.s32 %s34, 1
    %s36 = scalar_select %p33, %s34, %s35
    %p39 = pneg %p33
    %p40 = scmp.eq.s32.totalorder %s10, 1
    %p41 = por %p39, %p40
    %p42 = scmp.ne.s32.totalorder %s34, %s37
    %p43 = scmp.eq.s32.totalorder %s10, 0
    %p44 = por %p42, %p43
    %p45 = scmp.ne.s32.totalorder %s34, %s37
    %p46 = scmp.eq.s32.totalorder %s15, 1
    %p47 = por %p45, %p46
    %p48 = scmp.ne.s32.totalorder %s37, %s38
    %p49 = scmp.eq.s32.totalorder %s15, 0
    %p50 = por %p48, %p49
    %p51 = scmp.ne.s32.totalorder %s37, %s38
    %p52 = scmp.eq.s32.totalorder %s16, 1
    %p53 = por %p51, %p52
    %p55 = scmp.ne.s32.totalorder %s38, %s54
    %p56 = scmp.eq.s32.totalorder %s16, 0
    %p57 = por %p55, %p56
    %s58 = ssub.s32 %s17, %s29
    %s59 = ssub.s32 %s18, %s25
    %s60 = sor.u32 %s58, %s59
    %p61 = scmp.eq.s32.totalorder %s60, 0
    %s63 = sadd.s32 %s62, 1
    %s64 = scalar_select %p61, %s62, %s63
    %p67 = pneg %p61
    %p68 = scmp.eq.s32.totalorder %s10, 1
    %p69 = por %p67, %p68
    %p70 = scmp.ne.s32.totalorder %s62, %s65
    %p71 = scmp.eq.s32.totalorder %s10, 0
    %p72 = por %p70, %p71
    %p73 = scmp.ne.s32.totalorder %s62, %s65
    %p74 = scmp.eq.s32.totalorder %s15, 1
    %p75 = por %p73, %p74
    %p76 = scmp.ne.s32.totalorder %s65, %s66
    %p77 = scmp.eq.s32.totalorder %s15, 0
    %p78 = por %p76, %p77
    %p79 = scmp.ne.s32.totalorder %s65, %s66
    %p80 = scmp.eq.s32.totalorder %s16, 1
    %p81 = por %p79, %p80
    %p83 = scmp.ne.s32.totalorder %s66, %s82
    %p84 = scmp.eq.s32.totalorder %s16, 0
    %p85 = por %p83, %p84
    %s86 = ssub.s32 %s17, %s29
    %s87 = ssub.s32 %s18, %s25
    %s88 = sor.u32 %s86, %s87
    %p89 = scmp.eq.s32.totalorder %s88, 0
    %s91 = sadd.s32 %s90, 1
    %s92 = scalar_select %p89, %s90, %s91
    %p95 = pneg %p89
    %p96 = scmp.eq.s32.totalorder %s10, 1
    %p97 = por %p95, %p96
    %p98 = scmp.ne.s32.totalorder %s90, %s93
    %p99 = scmp.eq.s32.totalorder %s10, 0
    %p100 = por %p98, %p99
    %p101 = scmp.ne.s32.totalorder %s90, %s93
    %p102 = scmp.eq.s32.totalorder %s15, 1
    %p103 = por %p101, %p102
    %p104 = scmp.ne.s32.totalorder %s93, %s94
    %p105 = scmp.eq.s32.totalorder %s15, 0
    %p106 = por %p104, %p105
    %p107 = scmp.ne.s32.totalorder %s93, %s94
    %p108 = scmp.eq.s32.totalorder %s16, 1
    %p109 = por %p107, %p108
    %p111 = scmp.ne.s32.totalorder %s94, %s110
    %p112 = scmp.eq.s32.totalorder %s16, 0
    %p113 = por %p111, %p112
    %s114 = sadd.s32 %s17, %s18
    %s115 = sadd.s32 %s29, %s25
    %s116 = ssub.s32 %s114, %s115
    %p117 = scmp.eq.s32.totalorder %s116, 0
    %s119 = sadd.s32 %s118, 1
    %s120 = scalar_select %p117, %s118, %s119
    %p123 = pneg %p117
    %p124 = scmp.eq.s32.totalorder %s10, 1
    %p125 = por %p123, %p124
    %p126 = scmp.ne.s32.totalorder %s118, %s121
    %p127 = scmp.eq.s32.totalorder %s10, 0
    %p128 = por %p126, %p127
    %p129 = scmp.ne.s32.totalorder %s118, %s121
    %p130 = scmp.eq.s32.totalorder %s15, 1
    %p131 = por %p129, %p130
    %p132 = scmp.ne.s32.totalorder %s121, %s122
    %p133 = scmp.eq.s32.totalorder %s15, 0
    %p134 = por %p132, %p133
    %p135 = scmp.ne.s32.totalorder %s121, %s122
    %p136 = scmp.eq.s32.totalorder %s16, 1
    %p137 = por %p135, %p136
    %p139 = scmp.ne.s32.totalorder %s122, %s138
    %p140 = scmp.eq.s32.totalorder %s16, 0
    %p141 = por %p139, %p140
    %p142 = scmp.le.s32.totalorder 1, %s10
    %p143 = scmp.lt.s32.totalorder %s10, 3
    %p144 = pnand %p142, %p143
    %p145 = pneg %p144
    // Predicated region
    $region9: #{forward.2} parent=5 // pred_check
      _
    $region10: #{forward.2} parent=5 // pred_check_branch
      %147 = sbr.rel (%p144) target = $region12
    $region11: #{forward.2} parent=5 // pred_region
      %s148 = ssub.s32 %s10, 1
    $region12: #{forward.2} parent=5 // pred_fallthru
      _
    %p149 = scmp.lt.s32.totalorder %s10, 2
    // Predicated region
    $region13: #{forward.2} parent=5 // pred_check
      %p150 = pneg %p149
    $region14: #{forward.2} parent=5 // pred_check_branch
      %152 = sbr.rel (%p150) target = $region16
    $region15: #{forward.2} parent=5 // pred_region
      // Predicated region
      $region17: #{forward.2} parent=15 // pred_check
        %p153 = pneg %p44
      $region18: #{forward.2} parent=15 // pred_check_branch
        %155 = sbr.rel (%p153) target = $region20
      $region19: #{forward.2} parent=15 // pred_region
        %s156 = smul.u32 2, %s18
        %p157 = scmp.lt.s32.totalorder %s17, 1
        %s158 = scalar_select %p157, %s17, 1
        %p159 = scmp.lt.s32.totalorder %s156, 1
        %s160 = scalar_select %p159, %s156, 1
        %s161 = smul.addr %s158, 2
        %s162 = sadd.s32 %s160, %s161
        %s163 = smul.addr %s162, 4
        %s164 = scalar_lea.vmem %s0, %s163
        %s165 = smul.u32 2, %s18
      $region20: #{forward.2} parent=15 // pred_fallthru
        _
      // Predicated region
      $region21: #{forward.2} parent=15 // pred_check
        %p166 = pneg %p72
      $region22: #{forward.2} parent=15 // pred_check_branch
        %168 = sbr.rel (%p166) target = $region24
      $region23: #{forward.2} parent=15 // pred_region
        %s169 = smul.u32 2, %s18
        %p170 = scmp.lt.s32.totalorder %s17, 1
        %s171 = scalar_select %p170, %s17, 1
        %p172 = scmp.lt.s32.totalorder %s169, 1
        %s173 = scalar_select %p172, %s169, 1
        %s174 = smul.addr %s171, 2
        %s175 = sadd.s32 %s173, %s174
        %s176 = scalar_lea.vmem %s1, %s175
        %s177 = smul.u32 2, %s18
      $region24: #{forward.2} parent=15 // pred_fallthru
        _
    $region16: #{forward.2} parent=5 // pred_fallthru
      _
    %p178 = scmp.le.s32.totalorder 1, %s10
    %p179 = scmp.lt.s32.totalorder %s10, 3
    %p180 = pnand %p178, %p179
    %p181 = pneg %p180
    // Predicated region
    $region25: #{forward.2} parent=5 // pred_check
      _
    $region26: #{forward.2} parent=5 // pred_check_branch
      %183 = sbr.rel (%p180) target = $region28
    $region27: #{forward.2} parent=5 // pred_region
      %s184 = ssub.s32 %s10, 1
      %s185 = smul.u32 2, %s20
      %p186 = scmp.lt.s32.totalorder %s19, 1
      %s187 = scalar_select %p186, %s19, 1
      %p188 = scmp.lt.s32.totalorder %s185, 1
      %s189 = scalar_select %p188, %s185, 1
      %s190 = smul.addr %s187, 2
      %s191 = sadd.s32 %s189, %s190
      %s192 = smul.addr %s191, 4
      %s193 = scalar_lea.vmem %s0, %s192
      %p194 = pneg %p50
      %p195 = pneg %p47
      %s196 = smul.u32 2, %s20
      %p197 = scmp.lt.s32.totalorder %s19, 1
      %s198 = scalar_select %p197, %s19, 1
      %p199 = scmp.lt.s32.totalorder %s196, 1
      %s200 = scalar_select %p199, %s196, 1
      %s201 = smul.addr %s198, 2
      %s202 = sadd.s32 %s200, %s201
      %s203 = scalar_lea.vmem %s1, %s202
      %p204 = pneg %p78
      %p205 = pneg %p75
      %p206 = pneg %p106
      %p207 = pneg %p103
      %s208 = smul.u32 2, %s20
      %p209 = scmp.lt.s32.totalorder %s19, 1
      %s210 = scalar_select %p209, %s19, 1
      %p211 = scmp.lt.s32.totalorder %s208, 1
      %s212 = scalar_select %p211, %s208, 1
      %s213 = smul.addr %s210, 2
      %s214 = sadd.s32 %s212, %s213
      %s215 = scalar_lea.vmem %s2, %s214
      %p216 = pneg %p134
      %p217 = pneg %p131
      %s218 = sadd.s32 %s19, %s20
      %p219 = scmp.lt.s32.totalorder %s218, 1
      %s220 = scalar_select %p219, %s218, 1
      %s221 = smul.addr %s220, 16
      %s222 = smul.addr %s221, 8
      %s223 = scalar_lea.vmem %s3, %s222
      %s224 = smul.u32 2, %s20
      %p225 = scmp.lt.s32.totalorder %s19, 1
      %s226 = scalar_select %p225, %s19, 1
      %p227 = scmp.lt.s32.totalorder %s224, 1
      %s228 = scalar_select %p227, %s224, 1
      %s229 = smul.addr %s226, 2
      %s230 = sadd.s32 %s228, %s229
      %s231 = smul.addr %s230, 4
      %s232 = scalar_lea.vmem %s0, %s231
      %s233 = smul.u32 2, %s20
      %s234 = smul.u32 2, %s20
      %p235 = scmp.lt.s32.totalorder %s19, 1
      %s236 = scalar_select %p235, %s19, 1
      %p237 = scmp.lt.s32.totalorder %s234, 1
      %s238 = scalar_select %p237, %s234, 1
      %s239 = smul.addr %s236, 2
      %s240 = sadd.s32 %s238, %s239
      %s241 = scalar_lea.vmem %s1, %s240
      %s242 = smul.u32 2, %s20
      %s243 = smul.u32 2, %s20
      %p244 = scmp.lt.s32.totalorder %s19, 1
      %s245 = scalar_select %p244, %s19, 1
      %p246 = scmp.lt.s32.totalorder %s243, 1
      %s247 = scalar_select %p246, %s243, 1
      %s248 = smul.addr %s245, 2
      %s249 = sadd.s32 %s247, %s248
      %s250 = scalar_lea.vmem %s2, %s249
      %s251 = smul.u32 2, %s20
      %s252 = sadd.s32 %s19, %s20
      %p253 = scmp.lt.s32.totalorder %s252, 1
      %s254 = scalar_select %p253, %s252, 1
      %s255 = smul.addr %s254, 16
      %s256 = smul.addr %s255, 8
      %s257 = scalar_lea.vmem %s3, %s256
      %s258 = sadd.s32 %s19, %s20
      %v259 = vld [vmem:[%s232] sm:$0xff]
      %v260 = vld [vmem:[%s241] sm:$0x3]
      %v261 = vlaneseq
      %v262 = vand.u32 %v261, 127
      %v263 = vadd.s32 %v262, 128
      %s264 = smul.u32 %s20, 256
      %v265 = vstv %s264
      %v266 = vadd.s32 %v265, %v262
      %v267 = vadd.s32 %v265, %v263
      %vm268 = vcmp.lt.s32.totalorder %v266, 256
      %vm269 = vcmp.lt.s32.totalorder %v267, 256
      %vm270 = vcmp.ne.s32.totalorder %v260, 4294967295
      %v271 = vsel %vm268, 1, 0
      %v272 = vsel %vm269, 1, 0
      %v273 = vcombine.low %v271, %v272
      %v275 = vunpack.c.l.s4 1966171168
      %v276 = vunpack.c.0.s8 %v275
      %v277 = vlaneseq
      %v278 = vshrl.u32 %v277, 7
      %v279 = vsub.s32 %v276, %v278
      %v280 = vrot.slane %v273, %v279
      %v282 = vunpack.c.l.s4 1966171168
      %v283 = vunpack.c.0.s8 %v282
      %v284 = vlaneseq
      %v285 = vshrl.u32 %v284, 7
      %v286 = vsub.s32 %v283, %v285
      %v287 = vrot.slane %v280, %v286
      %vm288 = vcmp.ne.s32.totalorder %v287, 0
      %vm289 = vmand %vm270, %vm288
      %v290 = vsel %vm289, %v260, 0
      %v292 = vcombine.high %v259, %v259
      %vm294 = vcmask 1043456
      %v295 = vsel %vm294, %v259, -inf
      %v296 = vrot.slane %v295, 4
      %v297 = vmax.f32 %v295, %v296
      %v298 = vrot.slane %v297, 2
      %v299 = vmax.f32 %v297, %v298
      %v300 = vrot.slane %v299, 1
      %v301 = vmax.f32 %v299, %v300
      %v302 = vsel %vm294, %v292, -inf
      %v303 = vrot.slane %v302, 4
      %v304 = vmax.f32 %v302, %v303
      %v305 = vrot.slane %v304, 2
      %v306 = vmax.f32 %v304, %v305
      %v307 = vrot.slane %v306, 1
      %v308 = vmax.f32 %v306, %v307
      %v311 = vcombine.low %v301, %v308
      %v313 = vsub.f32 %v259, %v311
      %v314 = vmul.f32 %v313, 1.442695
      %v315 = vpow.pop %v314
      %v317 = vcombine.high %v315, %v315
      %v319 = vsel %vm294, %v315, 0.0
      %v320 = vrot.slane %v319, 4
      %v321 = vadd.f32 %v319, %v320
      %v322 = vrot.slane %v321, 2
      %v323 = vadd.f32 %v321, %v322
      %v324 = vrot.slane %v323, 1
      %v325 = vadd.f32 %v323, %v324
      %v326 = vsel %vm294, %v317, 0.0
      %v327 = vrot.slane %v326, 4
      %v328 = vadd.f32 %v326, %v327
      %v329 = vrot.slane %v328, 2
      %v330 = vadd.f32 %v328, %v329
      %v331 = vrot.slane %v330, 1
      %v332 = vadd.f32 %v330, %v331
      %v333 = vlog2.pop %v325
      %v334 = vmul.f32 %v333, 0.6931472
      %v335 = vlog2.pop %v332
      %v336 = vmul.f32 %v335, 0.6931472
      %v337 = vadd.f32 %v334, %v301
      %v338 = vadd.f32 %v336, %v308
      %v339 = vlaneseq
      %v340 = vshrl.u32 %v339, 7
      %v341 = vlaneseq
      %v342 = vshrl.u32 %v341, 7
      %v343 = vsub.s32 0, %v342
      %v344 = vrot.slane %v290, %v343
      %v345 = vlaneseq
      %v346 = vshrl.u32 %v345, 7
      %v347 = vsub.s32 1, %v346
      %v348 = vrot.slane %v290, %v347
      %vm349 = vcmp.eq.s32.totalorder %v340, %v344
      %vm350 = vcmp.eq.s32.totalorder %v340, %v348
      %v351 = vsel %vm349, 1, 0
      %v352 = vsel %vm350, 1, 0
      %v353 = vcvt.s32.f32 %v351
      %v354 = vcvt.s32.f32 %v352
      %v357 = vcombine.low %v353, %v354
      %v359 = vmul.f32 %v259, %v357
      %v361 = vcombine.high %v359, %v359
      %v363 = vsel %vm294, %v359, 0.0
      %v364 = vrot.slane %v363, 4
      %v365 = vadd.f32 %v363, %v364
      %v366 = vrot.slane %v365, 2
      %v367 = vadd.f32 %v365, %v366
      %v368 = vrot.slane %v367, 1
      %v369 = vadd.f32 %v367, %v368
      %v370 = vsel %vm294, %v361, 0.0
      %v371 = vrot.slane %v370, 4
      %v372 = vadd.f32 %v370, %v371
      %v373 = vrot.slane %v372, 2
      %v374 = vadd.f32 %v372, %v373
      %v375 = vrot.slane %v374, 1
      %v376 = vadd.f32 %v374, %v375
      %v377 = vsub.f32 %v337, %v369
      %v378 = vsub.f32 %v338, %v376
      %v381 = vcombine.low %v377, %v378
      %v383 = vunpack.c.l.s4 1966171168
      %v384 = vunpack.c.0.s8 %v383
      %v385 = vlaneseq
      %v386 = vshrl.u32 %v385, 7
      %v387 = vsub.s32 %v384, %v386
      %v388 = vrot.slane %v381, %v387
      %v390 = vunpack.c.l.s4 1966171168
      %v391 = vunpack.c.0.s8 %v390
      %v392 = vlaneseq
      %v393 = vshrl.u32 %v392, 7
      %v394 = vsub.s32 %v391, %v393
      %v395 = vrot.slane %v388, %v394
      %v397 = vsel %vm289, %v395, -1.0
      %v398 = vlaneseq
      %vm399 = vcmp.ge.s32.totalorder %v398, 0
      %vm400 = vcmp.lt.s32.totalorder %v398, 256
      %vm401 = vmand %vm399, %vm400
      %402 = vst.msk [vmem:[%s250] sm:$0x3] %vm401, %v397
      %v403 = vmul.f32 %v377, 356.0665
      %v404 = vmul.f32 %v378, 356.0665
      %v405 = vfloor.f32 %v403
      %v406 = vfloor.f32 %v404
      %v407 = vcvt.f32.s32.to.zero.pseudo %v405
      %v408 = vcvt.f32.s32.to.zero.pseudo %v406
      %vm409 = vcmp.gt.s32.totalorder %v407, 0
      %v410 = vsel %vm409, %v407, 0
      %vm411 = vcmp.gt.s32.totalorder %v408, 0
      %v412 = vsel %vm411, %v408, 0
      %vm413 = vcmp.lt.s32.totalorder %v410, 127
      %v414 = vsel %vm413, %v410, 127
      %vm415 = vcmp.lt.s32.totalorder %v412, 127
      %v416 = vsel %vm415, %v412, 127
      %v417 = vcombine.low %v414, %v416
      %v419 = vunpack.c.l.s4 1966171168
      %v420 = vunpack.c.0.s8 %v419
      %v421 = vlaneseq
      %v422 = vshrl.u32 %v421, 7
      %v423 = vsub.s32 %v420, %v422
      %v424 = vrot.slane %v417, %v423
      %v426 = vunpack.c.l.s4 1966171168
      %v427 = vunpack.c.0.s8 %v426
      %v428 = vlaneseq
      %v429 = vshrl.u32 %v428, 7
      %v430 = vsub.s32 %v427, %v429
      %v431 = vrot.slane %v424, %v430
      %v432 = vsel %vm289, %v431, 4294967295
      %433 = vst.msk [vmem:[#allocation2] sm:$0x3] %vm401, %v432
      %v434 = vadd.s32 %v340, 8
      %v435 = vadd.s32 %v340, 16
      %v436 = vadd.s32 %v340, 24
      %v437 = vadd.s32 %v340, 32
      %v438 = vadd.s32 %v340, 40
      %v439 = vadd.s32 %v340, 48
      %v440 = vadd.s32 %v340, 56
      %v441 = vadd.s32 %v340, 64
      %v442 = vadd.s32 %v340, 72
      %v443 = vadd.s32 %v340, 80
      %v444 = vadd.s32 %v340, 88
      %v445 = vadd.s32 %v340, 96
      %v446 = vadd.s32 %v340, 104
      %v447 = vadd.s32 %v340, 112
      %v448 = vadd.s32 %v340, 120
      %v449 = vld [vmem:[#allocation2] sm:$0x3]
      %v450 = vlaneseq
      %v451 = vshrl.u32 %v450, 7
      %v452 = vsub.s32 0, %v451
      %v453 = vrot.slane %v449, %v452
      %v454 = vlaneseq
      %v455 = vshrl.u32 %v454, 7
      %v456 = vsub.s32 1, %v455
      %v457 = vrot.slane %v449, %v456
      %vm458 = vcmp.eq.s32.totalorder %v453, %v340
      %vm459 = vcmp.eq.s32.totalorder %v457, %v340
      %vm460 = vcmp.eq.s32.totalorder %v453, %v434
      %vm461 = vcmp.eq.s32.totalorder %v457, %v434
      %vm462 = vcmp.eq.s32.totalorder %v453, %v435
      %vm463 = vcmp.eq.s32.totalorder %v457, %v435
      %vm464 = vcmp.eq.s32.totalorder %v453, %v436
      %vm465 = vcmp.eq.s32.totalorder %v457, %v436
      %vm466 = vcmp.eq.s32.totalorder %v453, %v437
      %vm467 = vcmp.eq.s32.totalorder %v457, %v437
      %vm468 = vcmp.eq.s32.totalorder %v453, %v438
      %vm469 = vcmp.eq.s32.totalorder %v457, %v438
      %vm470 = vcmp.eq.s32.totalorder %v453, %v439
      %vm471 = vcmp.eq.s32.totalorder %v457, %v439
      %vm472 = vcmp.eq.s32.totalorder %v453, %v440
      %vm473 = vcmp.eq.s32.totalorder %v457, %v440
      %vm474 = vcmp.eq.s32.totalorder %v453, %v441
      %vm475 = vcmp.eq.s32.totalorder %v457, %v441
      %vm476 = vcmp.eq.s32.totalorder %v453, %v442
      %vm477 = vcmp.eq.s32.totalorder %v457, %v442
      %vm478 = vcmp.eq.s32.totalorder %v453, %v443
      %vm479 = vcmp.eq.s32.totalorder %v457, %v443
      %vm480 = vcmp.eq.s32.totalorder %v453, %v444
      %vm481 = vcmp.eq.s32.totalorder %v457, %v444
      %vm482 = vcmp.eq.s32.totalorder %v453, %v445
      %vm483 = vcmp.eq.s32.totalorder %v457, %v445
      %vm484 = vcmp.eq.s32.totalorder %v453, %v446
      %vm485 = vcmp.eq.s32.totalorder %v457, %v446
      %vm486 = vcmp.eq.s32.totalorder %v453, %v447
      %vm487 = vcmp.eq.s32.totalorder %v457, %v447
      %vm488 = vcmp.eq.s32.totalorder %v453, %v448
      %vm489 = vcmp.eq.s32.totalorder %v457, %v448
      %v490 = vsel %vm458, 1, 0
      %v491 = vsel %vm459, 1, 0
      %v492 = vsel %vm460, 1, 0
      %v493 = vsel %vm461, 1, 0
      %v494 = vsel %vm462, 1, 0
      %v495 = vsel %vm463, 1, 0
      %v496 = vsel %vm464, 1, 0
      %v497 = vsel %vm465, 1, 0
      %v498 = vsel %vm466, 1, 0
      %v499 = vsel %vm467, 1, 0
      %v500 = vsel %vm468, 1, 0
      %v501 = vsel %vm469, 1, 0
      %v502 = vsel %vm470, 1, 0
      %v503 = vsel %vm471, 1, 0
      %v504 = vsel %vm472, 1, 0
      %v505 = vsel %vm473, 1, 0
      %v506 = vsel %vm474, 1, 0
      %v507 = vsel %vm475, 1, 0
      %v508 = vsel %vm476, 1, 0
      %v509 = vsel %vm477, 1, 0
      %v510 = vsel %vm478, 1, 0
      %v511 = vsel %vm479, 1, 0
      %v512 = vsel %vm480, 1, 0
      %v513 = vsel %vm481, 1, 0
      %v514 = vsel %vm482, 1, 0
      %v515 = vsel %vm483, 1, 0
      %v516 = vsel %vm484, 1, 0
      %v517 = vsel %vm485, 1, 0
      %v518 = vsel %vm486, 1, 0
      %v519 = vsel %vm487, 1, 0
      %v520 = vsel %vm488, 1, 0
      %v521 = vsel %vm489, 1, 0
      %v522 = vcvt.s32.f32 %v490
      %v523 = vcvt.s32.f32 %v491
      %v524 = vcvt.s32.f32 %v492
      %v525 = vcvt.s32.f32 %v493
      %v526 = vcvt.s32.f32 %v494
      %v527 = vcvt.s32.f32 %v495
      %v528 = vcvt.s32.f32 %v496
      %v529 = vcvt.s32.f32 %v497
      %v530 = vcvt.s32.f32 %v498
      %v531 = vcvt.s32.f32 %v499
      %v532 = vcvt.s32.f32 %v500
      %v533 = vcvt.s32.f32 %v501
      %v534 = vcvt.s32.f32 %v502
      %v535 = vcvt.s32.f32 %v503
      %v536 = vcvt.s32.f32 %v504
      %v537 = vcvt.s32.f32 %v505
      %v538 = vcvt.s32.f32 %v506
      %v539 = vcvt.s32.f32 %v507
      %v540 = vcvt.s32.f32 %v508
      %v541 = vcvt.s32.f32 %v509
      %v542 = vcvt.s32.f32 %v510
      %v543 = vcvt.s32.f32 %v511
      %v544 = vcvt.s32.f32 %v512
      %v545 = vcvt.s32.f32 %v513
      %v546 = vcvt.s32.f32 %v514
      %v547 = vcvt.s32.f32 %v515
      %v548 = vcvt.s32.f32 %v516
      %v549 = vcvt.s32.f32 %v517
      %v550 = vcvt.s32.f32 %v518
      %v551 = vcvt.s32.f32 %v519
      %v552 = vcvt.s32.f32 %v520
      %v553 = vcvt.s32.f32 %v521
      %v554 = vadd.f32 %v522, %v523
      %v555 = vadd.f32 %v524, %v525
      %v556 = vadd.f32 %v526, %v527
      %v557 = vadd.f32 %v528, %v529
      %v558 = vadd.f32 %v530, %v531
      %v559 = vadd.f32 %v532, %v533
      %v560 = vadd.f32 %v534, %v535
      %v561 = vadd.f32 %v536, %v537
      %v562 = vadd.f32 %v538, %v539
      %v563 = vadd.f32 %v540, %v541
      %v564 = vadd.f32 %v542, %v543
      %v565 = vadd.f32 %v544, %v545
      %v566 = vadd.f32 %v546, %v547
      %v567 = vadd.f32 %v548, %v549
      %v568 = vadd.f32 %v550, %v551
      %v569 = vadd.f32 %v552, %v553
      %v570 = vadd.f32 %v554, 0.0
      %v571 = vadd.f32 %v555, 0.0
      %v572 = vadd.f32 %v556, 0.0
      %v573 = vadd.f32 %v557, 0.0
      %v574 = vadd.f32 %v558, 0.0
      %v575 = vadd.f32 %v559, 0.0
      %v576 = vadd.f32 %v560, 0.0
      %v577 = vadd.f32 %v561, 0.0
      %v578 = vadd.f32 %v562, 0.0
      %v579 = vadd.f32 %v563, 0.0
      %v580 = vadd.f32 %v564, 0.0
      %v581 = vadd.f32 %v565, 0.0
      %v582 = vadd.f32 %v566, 0.0
      %v583 = vadd.f32 %v567, 0.0
      %v584 = vadd.f32 %v568, 0.0
      %v585 = vadd.f32 %v569, 0.0
      %586 = vadd.xlane.f32.xlu0 %v570
      %v587 = vpop.xlane.xlu0 %586
      %588 = vadd.xlane.f32.xlu0 %v571
      %v589 = vpop.xlane.xlu0 %588
      %590 = vadd.xlane.f32.xlu0 %v572
      %v591 = vpop.xlane.xlu0 %590
      %592 = vadd.xlane.f32.xlu0 %v573
      %v593 = vpop.xlane.xlu0 %592
      %594 = vadd.xlane.f32.xlu0 %v574
      %v595 = vpop.xlane.xlu0 %594
      %596 = vadd.xlane.f32.xlu0 %v575
      %v597 = vpop.xlane.xlu0 %596
      %598 = vadd.xlane.f32.xlu0 %v576
      %v599 = vpop.xlane.xlu0 %598
      %600 = vadd.xlane.f32.xlu0 %v577
      %v601 = vpop.xlane.xlu0 %600
      %602 = vadd.xlane.f32.xlu0 %v578
      %v603 = vpop.xlane.xlu0 %602
      %604 = vadd.xlane.f32.xlu0 %v579
      %v605 = vpop.xlane.xlu0 %604
      %606 = vadd.xlane.f32.xlu0 %v580
      %v607 = vpop.xlane.xlu0 %606
      %608 = vadd.xlane.f32.xlu0 %v581
      %v609 = vpop.xlane.xlu0 %608
      %610 = vadd.xlane.f32.xlu0 %v582
      %v611 = vpop.xlane.xlu0 %610
      %612 = vadd.xlane.f32.xlu0 %v583
      %v613 = vpop.xlane.xlu0 %612
      %614 = vadd.xlane.f32.xlu0 %v584
      %v615 = vpop.xlane.xlu0 %614
      %616 = vadd.xlane.f32.xlu0 %v585
      %v617 = vpop.xlane.xlu0 %616
      %vm618 = vcmask 7168
      %619 = vst.msk [vmem:[%s257] sm:$0xff] %vm618, %v587
      %620 = vst.msk [vmem:[%s257 + $0x8] sm:$0xff] %vm618, %v589
      %621 = vst.msk [vmem:[%s257 + $0x10] sm:$0xff] %vm618, %v591
      %622 = vst.msk [vmem:[%s257 + $0x18] sm:$0xff] %vm618, %v593
      %623 = vst.msk [vmem:[%s257 + $0x20] sm:$0xff] %vm618, %v595
      %624 = vst.msk [vmem:[%s257 + $0x28] sm:$0xff] %vm618, %v597
      %625 = vst.msk [vmem:[%s257 + $0x30] sm:$0xff] %vm618, %v599
      %626 = vst.msk [vmem:[%s257 + $0x38] sm:$0xff] %vm618, %v601
      %627 = vst.msk [vmem:[%s257 + $0x40] sm:$0xff] %vm618, %v603
      %628 = vst.msk [vmem:[%s257 + $0x48] sm:$0xff] %vm618, %v605
      %629 = vst.msk [vmem:[%s257 + $0x50] sm:$0xff] %vm618, %v607
      %630 = vst.msk [vmem:[%s257 + $0x58] sm:$0xff] %vm618, %v609
      %631 = vst.msk [vmem:[%s257 + $0x60] sm:$0xff] %vm618, %v611
      %632 = vst.msk [vmem:[%s257 + $0x68] sm:$0xff] %vm618, %v613
      %633 = vst.msk [vmem:[%s257 + $0x70] sm:$0xff] %vm618, %v615
      %634 = vst.msk [vmem:[%s257 + $0x78] sm:$0xff] %vm618, %v617
      %s635 = smul.u32 2, %s20
      %p636 = scmp.lt.s32.totalorder %s19, 1
      %s637 = scalar_select %p636, %s19, 1
      %p638 = scmp.lt.s32.totalorder %s635, 1
      %s639 = scalar_select %p638, %s635, 1
      %s640 = smul.addr %s637, 2
      %s641 = sadd.s32 %s639, %s640
      %s642 = scalar_lea.vmem %s2, %s641
      %s643 = sadd.s32 %s19, %s20
      %p644 = scmp.lt.s32.totalorder %s643, 1
      %s645 = scalar_select %p644, %s643, 1
      %s646 = smul.addr %s645, 16
      %s647 = smul.addr %s646, 8
      %s648 = scalar_lea.vmem %s3, %s647
      // Predicated region
      $region29: #{forward.2} parent=27 // pred_check
        %p649 = pneg %p103
      $region30: #{forward.2} parent=27 // pred_check_branch
        %651 = sbr.rel (%p649) target = $region32
      $region31: #{forward.2} parent=27 // pred_region
        %s652 = smul.u32 2, %s20
      $region32: #{forward.2} parent=27 // pred_fallthru
        _
      // Predicated region
      $region33: #{forward.2} parent=27 // pred_check
        %p653 = pneg %p131
      $region34: #{forward.2} parent=27 // pred_check_branch
        %655 = sbr.rel (%p653) target = $region36
      $region35: #{forward.2} parent=27 // pred_region
        %s656 = sadd.s32 %s19, %s20
      $region36: #{forward.2} parent=27 // pred_fallthru
        _
    $region28: #{forward.2} parent=5 // pred_fallthru
      _
    %p657 = scmp.le.s32.totalorder 2, %s10
    // Predicated region
    $region37: #{forward.2} parent=5 // pred_check
      %p658 = pneg %p657
    $region38: #{forward.2} parent=5 // pred_check_branch
      %660 = sbr.rel (%p658) target = $region40
    $region39: #{forward.2} parent=5 // pred_region
      %s661 = ssub.s32 %s10, 2
      // Predicated region
      $region41: #{forward.2} parent=39 // pred_check
        %p662 = pneg %p109
      $region42: #{forward.2} parent=39 // pred_check_branch
        %664 = sbr.rel (%p662) target = $region44
      $region43: #{forward.2} parent=39 // pred_region
        %s665 = smul.u32 2, %s22
        %p666 = scmp.lt.s32.totalorder %s21, 1
        %s667 = scalar_select %p666, %s21, 1
        %p668 = scmp.lt.s32.totalorder %s665, 1
        %s669 = scalar_select %p668, %s665, 1
        %s670 = smul.addr %s667, 2
        %s671 = sadd.s32 %s669, %s670
        %s672 = scalar_lea.vmem %s2, %s671
      $region44: #{forward.2} parent=39 // pred_fallthru
        _
      // Predicated region
      $region45: #{forward.2} parent=39 // pred_check
        %p673 = pneg %p137
      $region46: #{forward.2} parent=39 // pred_check_branch
        %675 = sbr.rel (%p673) target = $region48
      $region47: #{forward.2} parent=39 // pred_region
        %s676 = sadd.s32 %s21, %s22
        %p677 = scmp.lt.s32.totalorder %s676, 1
        %s678 = scalar_select %p677, %s676, 1
        %s679 = smul.addr %s678, 16
        %s680 = smul.addr %s679, 8
        %s681 = scalar_lea.vmem %s3, %s680
      $region48: #{forward.2} parent=39 // pred_fallthru
        _
    $region40: #{forward.2} parent=5 // pred_fallthru
      _
  $region6: #{forward.2} parent=0 // loop_footer
    %s14 = sadd.s32 1, %s10
  $region7: #{forward.2} parent=0 // loop_footer_branch
    %9 = sbr.rel target = $region3
  $region8: #{forward.2} parent=0 // loop_exit
    _

</llo_original>
